<compile_context>
chip_gen: v6e
topology: v6e:2x2x1
jax: 0.10.0
libtpu: 0.0.40
codegen_flags: <defaults>
</compile_context>

<pallas_src>
import functools

import jax
import jax.numpy as jnp
import numpy as np
from jax import lax
from jax.experimental import pallas as pl
from jax.experimental.pallas import tpu as pltpu


def _nt_xent_kernel(zq_ref, zp_ref, zd_ref, zk_ref, out_ref, acc_ref, *,
                    shift, exp_dtype):
    """One (row-tile qi, col-tile ki) step of the NT-Xent loss.

    zq_ref  : (TQ, D)  matmul_dtype  row tile of z_hat/t (+ pad lane -1/t); resident per qi
    zp_ref  : (TQ, D)  matmul_dtype  positive-partner rows ((i + B) mod N), k-side array
    zd_ref  : (TQ, D)  matmul_dtype  k-side rows at the row-tile index (exact diag term)
    zk_ref  : (TK, D)  matmul_dtype  streamed column tile of the k-side array
    out_ref : (1, 1, TQ) f32         per-row losses for this row tile (written at last ki)
    acc_ref : (8, TQ) f32            per-sublane partial sums of exp(u_ij)
    shift   : python float           0.0 if -1/t is baked into a pad lane, else 1/t
    """
    ki = pl.program_id(1)

    @pl.when(ki == 0)
    def _init():
        acc_ref[...] = jnp.zeros_like(acc_ref)

    # Shifted-logit tile u^T[a, b] = <zk[a], zq[b]> = cos_ab/t - 1/t (pad-lane shift).
    # Contraction on the LAST dim of both operands -> MXU, no explicit XLU transpose.
    u_t = lax.dot_general(zk_ref[...], zq_ref[...],
                          dimension_numbers=(((1,), (1,)), ((), ())),
                          preferred_element_type=jnp.float32)            # (TK, TQ)
    if shift:                                   # only when no spare pad lane exists
        u_t = u_t - shift
    tk, tq = u_t.shape
    u3 = u_t.reshape(tk // 8, 8, tq)            # sublane-aligned split (groups of 8)
    if jnp.dtype(exp_dtype) != jnp.dtype(jnp.float32):
        u3 = u3.astype(exp_dtype)               # bf16 exp: ~2x EUP on v6e/v7x
    e3 = jnp.exp(u3)
    # Per-sublane partial sums only; the single cross-sublane collapse is deferred
    # to the finalize so the hot loop stays on full vregs (VPU adds, no XLU).
    acc_ref[...] += jnp.sum(e3.astype(jnp.float32), axis=0)              # (8, TQ)

    @pl.when(ki == pl.num_programs(1) - 1)
    def _finalize():
        ones_row = jnp.ones((1, zq_ref.shape[1]), jnp.float32)
        zq = zq_ref[...].astype(jnp.float32)
        # Row-wise dots as tiny ones-matmuls -> lane-oriented (1, TQ) outputs.
        pos = lax.dot_general(ones_row, zq * zp_ref[...].astype(jnp.float32),
                              dimension_numbers=(((1,), (1,)), ((), ())),
                              preferred_element_type=jnp.float32)        # u_pos (1, TQ)
        diag = lax.dot_general(ones_row, zq * zd_ref[...].astype(jnp.float32),
                               dimension_numbers=(((1,), (1,)), ((), ())),
                               preferred_element_type=jnp.float32)       # u_ii  (1, TQ)
        if shift:
            pos = pos - shift
            diag = diag - shift
        acc_tot = jnp.sum(acc_ref[...], axis=0, keepdims=True)           # (1, TQ)
        # Remove exactly the diagonal term that was accumulated (bf16 rows make
        # <z_i, z_i> != 1, so exp(u_ii) != 1).  Tiny floor guards the log against
        # pathological cancellation.
        neg_sum = jnp.maximum(acc_tot - jnp.exp(diag), 1e-30)
        out_ref[...] = (jnp.log(neg_sum) - pos)[None]                    # (1, 1, TQ)


def _largest_tile(n, cap):
    """Largest multiple of 8 that divides n and is <= cap (n must be a multiple of 8)."""
    t = min(cap, n)
    t -= t % 8
    while t >= 8:
        if n % t == 0:
            return t
        t -= 8
    raise ValueError(f"no multiple-of-8 tile divides {n}")


def nt_xent_loss(z_i, z_j, *, temperature, world_size=1,
                 matmul_dtype=jnp.bfloat16, exp_dtype=None,
                 tq_cap=512, tk_cap=1024, zk_buffers=2,
                 vmem_budget_bytes=48 * 1024 * 1024):
    """Forward NT-Xent loss, matching torch NT_Xent(batch_size, temperature, 1).

    matmul_dtype : dtype of the MXU inputs (bf16 default; jnp.float32 = exact path).
    exp_dtype    : dtype fed to exp (defaults to matmul_dtype).  Pass jnp.float32
                   on v5e, which has no bf16 EUP.
    zk_buffers   : pipeline depth for the streamed column tile (set 3 on v5e if the
                   zk HBM stream is still exposed after the bf16 cast).
    """
    assert world_size == 1, "GatherLayer (dist.all_gather) not supported here"
    b = z_i.shape[0] * world_size            # "batch_size * world_size" in the torch code
    n = 2 * b
    assert b % 8 == 0, "batch_size * world_size must be a multiple of 8"
    # TODO(synk): non-multiple-of-8 batches would need row padding + loss masking.

    inv_t = 1.0 / float(temperature)
    matmul_dtype = jnp.dtype(matmul_dtype)
    exp_dtype = matmul_dtype if exp_dtype is None else jnp.dtype(exp_dtype)

    # ---- O(N*D) prep in XLA: concat, normalize ONCE, pad, scale, cast -------------
    z = jnp.concatenate([z_i, z_j], axis=0).astype(jnp.float32)
    d = z.shape[1]
    sq = jnp.sum(z * z, axis=-1, keepdims=True)
    z_hat = z * lax.rsqrt(jnp.maximum(sq, 1e-16))    # unit rows (CosineSimilarity eps)

    d_pad = max(128, ((d + 127) // 128) * 128)       # lane alignment (zeros are harmless)
    if d_pad != d:
        z_hat = jnp.pad(z_hat, ((0, 0), (0, d_pad - d)))

    zq_a = z_hat * inv_t                             # fold 1/t into the q-side rows
    shift_in_pad = d_pad > d
    if shift_in_pad:
        # Bake the constant -1/t logsumexp shift into a spare pad lane:
        # q pad lane = -1/t, k pad lane = 1  =>  the matmul yields u = cos/t - 1/t.
        zq_a = zq_a.at[:, d].set(-inv_t)
        zk_a = z_hat.at[:, d].set(1.0)
        shift = 0.0
    else:
        zk_a = z_hat
        shift = inv_t                                # subtract explicitly in-kernel
    zq_a = zq_a.astype(matmul_dtype)
    zk_a = zk_a.astype(matmul_dtype)

    # ---- tile selection under an explicit VMEM budget ------------------------------
    tq = _largest_tile(b, tq_cap)    # tq | B so a row tile's positive partners form one tile
    tk = _largest_tile(n, tk_cap)

    itemsize = matmul_dtype.itemsize

    def est_vmem(tq_, tk_):
        inputs = (2 * 3 * tq_ + zk_buffers * tk_) * d_pad * itemsize   # pipelined input bufs
        interm = 3 * tk_ * tq_ * 4                                     # u_t / exp temporaries
        scratch = (8 + 2) * tq_ * 4
        return inputs + interm + scratch

    budget = int(0.8 * vmem_budget_bytes)
    while est_vmem(tq, tk) > budget and tk > 8:
        tk = _largest_tile(n, max(8, tk // 2))
    while est_vmem(tq, tk) > budget and tq > 8:
        tq = _largest_tile(b, max(8, tq // 2))

    num_q, num_k = n // tq, n // tk      # num_q >= 2 always (tq <= B) -> both v7x TCs used
    pos_off = (b // tq) % num_q

    kernel = functools.partial(_nt_xent_kernel, shift=shift, exp_dtype=exp_dtype)

    zk_spec_kwargs = {}
    if zk_buffers != 2:                  # deeper buffering knob for v5e's slower HBM
        zk_spec_kwargs["pipeline_mode"] = pl.Buffered(zk_buffers)

    per_row = pl.pallas_call(
        kernel,
        out_shape=jax.ShapeDtypeStruct((num_q, 1, tq), jnp.float32),
        grid_spec=pltpu.PrefetchScalarGridSpec(
            num_scalar_prefetch=0,
            grid=(num_q, num_k),                       # reduction axis (ki) is last
            in_specs=[
                # resident row tile of the 1/t-scaled q-side array (DMA'd once per qi)
                pl.BlockSpec((tq, d_pad), lambda qi, ki: (qi, 0)),
                # positive-partner rows (i + B) mod N of the k-side array
                pl.BlockSpec((tq, d_pad),
                             lambda qi, ki: ((qi + pos_off) % num_q, 0)),
                # k-side rows at the row-tile index (exact diagonal correction)
                pl.BlockSpec((tq, d_pad), lambda qi, ki: (qi, 0)),
                # streamed column tile
                pl.BlockSpec((tk, d_pad), lambda qi, ki: (ki, 0), **zk_spec_kwargs),
            ],
            out_specs=pl.BlockSpec((1, 1, tq), lambda qi, ki: (qi, 0, 0)),
            scratch_shapes=[
                pltpu.VMEM((8, tq), jnp.float32),      # per-sublane running exp-sums
            ]),
        compiler_params=pltpu.CompilerParams(
            dimension_semantics=("parallel", "arbitrary"),
            vmem_limit_bytes=int(vmem_budget_bytes)),
    )(zq_a, zk_a, zk_a, zk_a)

    # CrossEntropyLoss(reduction='sum') over [pos, negatives], then / N.
    return jnp.sum(per_row) / jnp.float32(n)


def _reference_loss(z_i, z_j, batch_size, temperature):
    """Pure-JAX reference mirroring the PyTorch NT_Xent forward (world_size=1)."""
    z = jnp.concatenate([z_i, z_j], axis=0).astype(jnp.float32)
    n = z.shape[0]
    norms = jnp.sqrt(jnp.sum(z * z, axis=-1, keepdims=True))
    sim = (z @ z.T) / jnp.maximum(norms * norms.T, 1e-8) / temperature
    idx = jnp.arange(n)
    pos = sim[idx, (idx + batch_size) % n]
    sim_nodiag = jnp.where(jnp.eye(n, dtype=bool), -jnp.inf, sim)
    lse = jax.scipy.special.logsumexp(sim_nodiag, axis=-1)
    return jnp.sum(lse - pos) / n


if __name__ == "__main__":
    batch_size = 8
    hidden = 32
    temperature = 0.5

    key = jax.random.PRNGKey(0)
    k1, k2 = jax.random.split(key)
    z_i = jax.random.normal(k1, (batch_size, hidden), dtype=jnp.float32)
    z_j = jax.random.normal(k2, (batch_size, hidden), dtype=jnp.float32)

    ref = _reference_loss(z_i, z_j, batch_size, temperature)

    # Exact-math path (f32 MXU inputs, f32 exp): tight parity with the reference.
    loss_f32 = nt_xent_loss(z_i, z_j, temperature=temperature, world_size=1,
                            matmul_dtype=jnp.float32)
    loss_f32 = jax.block_until_ready(loss_f32)
    np.testing.assert_allclose(np.asarray(loss_f32), np.asarray(ref),
                               rtol=1e-5, atol=1e-5)

    # Performance path (bf16 MXU inputs, bf16 exp, f32 accumulation everywhere).
    loss_bf16 = nt_xent_loss(z_i, z_j, temperature=temperature, world_size=1,
                             matmul_dtype=jnp.bfloat16)
    loss_bf16 = jax.block_until_ready(loss_bf16)
    np.testing.assert_allclose(np.asarray(loss_bf16), np.asarray(ref),
                               rtol=2e-2, atol=2e-2)

    print("KERNEL_OK")
</pallas_src>

<mosaic_0001>
module attributes {stable_mosaic.version = 11 : i64} {
  func.func @_nt_xent_kernel(%arg0: i32, %arg1: i32, %arg2: memref<8x128xf32, #tpu.memory_space<vmem>>, %arg3: memref<8x128xf32, #tpu.memory_space<vmem>>, %arg4: memref<8x128xf32, #tpu.memory_space<vmem>>, %arg5: memref<16x128xf32, #tpu.memory_space<vmem>>, %arg6: memref<1x1x8xf32, #tpu.memory_space<vmem>>, %arg7: memref<8x8xf32, #tpu.memory_space<vmem>>) attributes {dimension_semantics = [#tpu.dimension_semantics<parallel>, #tpu.dimension_semantics<arbitrary>], iteration_bounds = array<i64: 2, 1>, scalar_prefetch = 0 : i64, scratch_operands = 1 : i64, tpu.core_type = #tpu.core_type<tc>, window_params = [{transform_indices = @transform_0, window_bounds = array<i64: 8, 128>}, {transform_indices = @transform_1, window_bounds = array<i64: 8, 128>}, {transform_indices = @transform_2, window_bounds = array<i64: 8, 128>}, {transform_indices = @transform_3, window_bounds = array<i64: 16, 128>}, {transform_indices = @transform_4, window_bounds = array<i64: 1, 1, 8>}]} {
    %c0_i32 = arith.constant 0 : i32
    %0 = arith.cmpi eq, %arg1, %c0_i32 : i32
    %1 = arith.extui %0 : i1 to i32
    %c0_i32_0 = arith.constant 0 : i32
    %2 = arith.cmpi ne, %1, %c0_i32_0 : i32
    scf.if %2 {
      %cst_11 = arith.constant 0.000000e+00 : f32
      %15 = vector.broadcast %cst_11 : f32 to vector<8x8xf32>
      %c0_12 = arith.constant 0 : index
      %c0_13 = arith.constant 0 : index
      %16 = vector.load %arg7[%c0_12, %c0_13] : memref<8x8xf32, #tpu.memory_space<vmem>>, vector<8x8xf32>
      tpu.vector_store %arg7[%c0_12, %c0_13], %15 {strides = array<i32>} : memref<8x8xf32, #tpu.memory_space<vmem>>, vector<8x8xf32>,
    } else {
    }
    %c0 = arith.constant 0 : index
    %c0_1 = arith.constant 0 : index
    %3 = vector.load %arg5[%c0, %c0_1] : memref<16x128xf32, #tpu.memory_space<vmem>>, vector<16x128xf32>
    %c0_2 = arith.constant 0 : index
    %c0_3 = arith.constant 0 : index
    %4 = vector.load %arg2[%c0_2, %c0_3] : memref<8x128xf32, #tpu.memory_space<vmem>>, vector<8x128xf32>
    %cst = arith.constant dense<0.000000e+00> : vector<16x8xf32>
    %5 = tpu.matmul %3, %4, %cst {dimension_numbers = #tpu.dot_dimension_numbers<[1], [1], [0], [0], [0, 0, 1, 0], [], []>} : vector<16x128xf32>, vector<8x128xf32>, vector<16x8xf32> -> vector<16x8xf32>
    %6 = vector.shape_cast %5 : vector<16x8xf32> to vector<2x8x8xf32>
    %7 = math.exp %6 : vector<2x8x8xf32>
    %c0_4 = arith.constant 0 : index
    %c0_5 = arith.constant 0 : index
    %8 = vector.load %arg7[%c0_4, %c0_5] : memref<8x8xf32, #tpu.memory_space<vmem>>, vector<8x8xf32>
    %cst_6 = arith.constant dense<0.000000e+00> : vector<8x8xf32>
    %9 = vector.multi_reduction <add>, %7, %cst_6 [0] : vector<2x8x8xf32> to vector<8x8xf32>
    %10 = arith.addf %8, %9 : vector<8x8xf32>
    %c0_7 = arith.constant 0 : index
    %c0_8 = arith.constant 0 : index
    %11 = vector.load %arg7[%c0_7, %c0_8] : memref<8x8xf32, #tpu.memory_space<vmem>>, vector<8x8xf32>
    tpu.vector_store %arg7[%c0_7, %c0_8], %10 {strides = array<i32>} : memref<8x8xf32, #tpu.memory_space<vmem>>, vector<8x8xf32>,
    %c0_i32_9 = arith.constant 0 : i32
    %12 = arith.cmpi eq, %arg1, %c0_i32_9 : i32
    %13 = arith.extui %12 : i1 to i32
    %c0_i32_10 = arith.constant 0 : i32
    %14 = arith.cmpi ne, %13, %c0_i32_10 : i32
    scf.if %14 {
      %cst_11 = arith.constant 1.000000e+00 : f32
      %15 = vector.broadcast %cst_11 : f32 to vector<1x128xf32>
      %c0_12 = arith.constant 0 : index
      %c0_13 = arith.constant 0 : index
      %16 = vector.load %arg2[%c0_12, %c0_13] : memref<8x128xf32, #tpu.memory_space<vmem>>, vector<8x128xf32>
      %c0_14 = arith.constant 0 : index
      %c0_15 = arith.constant 0 : index
      %17 = vector.load %arg3[%c0_14, %c0_15] : memref<8x128xf32, #tpu.memory_space<vmem>>, vector<8x128xf32>
      %18 = arith.mulf %16, %17 : vector<8x128xf32>
      %cst_16 = arith.constant dense<0.000000e+00> : vector<1x8xf32>
      %19 = tpu.matmul %15, %18, %cst_16 {dimension_numbers = #tpu.dot_dimension_numbers<[1], [1], [0], [0], [0, 0, 1, 0], [], []>} : vector<1x128xf32>, vector<8x128xf32>, vector<1x8xf32> -> vector<1x8xf32>
      %c0_17 = arith.constant 0 : index
      %c0_18 = arith.constant 0 : index
      %20 = vector.load %arg4[%c0_17, %c0_18] : memref<8x128xf32, #tpu.memory_space<vmem>>, vector<8x128xf32>
      %21 = arith.mulf %16, %20 : vector<8x128xf32>
      %cst_19 = arith.constant dense<0.000000e+00> : vector<1x8xf32>
      %22 = tpu.matmul %15, %21, %cst_19 {dimension_numbers = #tpu.dot_dimension_numbers<[1], [1], [0], [0], [0, 0, 1, 0], [], []>} : vector<1x128xf32>, vector<8x128xf32>, vector<1x8xf32> -> vector<1x8xf32>
      %c0_20 = arith.constant 0 : index
      %c0_21 = arith.constant 0 : index
      %23 = vector.load %arg7[%c0_20, %c0_21] : memref<8x8xf32, #tpu.memory_space<vmem>>, vector<8x8xf32>
      %cst_22 = arith.constant dense<0.000000e+00> : vector<8xf32>
      %24 = vector.multi_reduction <add>, %23, %cst_22 [0] : vector<8x8xf32> to vector<8xf32>
      %25 = vector.shape_cast %24 : vector<8xf32> to vector<1x8xf32>
      %26 = math.exp %22 : vector<1x8xf32>
      %27 = arith.subf %25, %26 : vector<1x8xf32>
      %cst_23 = arith.constant 1.000000e-30 : f32
      %28 = vector.broadcast %cst_23 : f32 to vector<1x8xf32>
      %29 = arith.maximumf %27, %28 : vector<1x8xf32>
      %30 = math.log %29 : vector<1x8xf32>
      %31 = arith.subf %30, %19 : vector<1x8xf32>
      %32 = vector.shape_cast %31 : vector<1x8xf32> to vector<1x1x8xf32>
      %c0_24 = arith.constant 0 : index
      %c0_25 = arith.constant 0 : index
      %c0_26 = arith.constant 0 : index
      %33 = vector.load %arg6[%c0_24, %c0_25, %c0_26] : memref<1x1x8xf32, #tpu.memory_space<vmem>>, vector<1x1x8xf32>
      tpu.vector_store %arg6[%c0_24, %c0_25, %c0_26], %32 {strides = array<i32>} : memref<1x1x8xf32, #tpu.memory_space<vmem>>, vector<1x1x8xf32>,
    } else {
    }
    return
  }
  func.func @transform_0(%arg0: i32, %arg1: i32) -> (i32, i32) {
    %c0_i32 = arith.constant 0 : i32
    %c0_i32_0 = arith.constant 0 : i32
    return %arg0, %c0_i32 : i32, i32
  }
  func.func @transform_1(%arg0: i32, %arg1: i32) -> (i32, i32) {
    %c1_i32 = arith.constant 1 : i32
    %0 = arith.addi %arg0, %c1_i32 : i32
    %c2_i32 = arith.constant 2 : i32
    %c0_i32 = arith.constant 0 : i32
    %1 = arith.cmpi eq, %c2_i32, %c0_i32 : i32
    %c1_i32_0 = arith.constant 1 : i32
    %2 = arith.select %1, %c1_i32_0, %c2_i32 : i32
    %3 = arith.remsi %0, %2 : i32
    %c0_i32_1 = arith.constant 0 : i32
    %4 = arith.cmpi ne, %3, %c0_i32_1 : i32
    %c0_i32_2 = arith.constant 0 : i32
    %5 = arith.cmpi slt, %3, %c0_i32_2 : i32
    %c0_i32_3 = arith.constant 0 : i32
    %6 = arith.cmpi slt, %2, %c0_i32_3 : i32
    %7 = arith.xori %5, %6 : i1
    %8 = arith.andi %7, %4 : i1
    %9 = arith.addi %3, %2 : i32
    %10 = arith.select %8, %9, %3 : i32
    %c0_i32_4 = arith.constant 0 : i32
    %c0_i32_5 = arith.constant 0 : i32
    return %10, %c0_i32_4 : i32, i32
  }
  func.func @transform_2(%arg0: i32, %arg1: i32) -> (i32, i32) {
    %c0_i32 = arith.constant 0 : i32
    %c0_i32_0 = arith.constant 0 : i32
    return %arg0, %c0_i32 : i32, i32
  }
  func.func @transform_3(%arg0: i32, %arg1: i32) -> (i32, i32) {
    %c0_i32 = arith.constant 0 : i32
    %c0_i32_0 = arith.constant 0 : i32
    return %arg1, %c0_i32 : i32, i32
  }
  func.func @transform_4(%arg0: i32, %arg1: i32) -> (i32, i32, i32) {
    %c0_i32 = arith.constant 0 : i32
    %c0_i32_0 = arith.constant 0 : i32
    %c0_i32_1 = arith.constant 0 : i32
    return %arg0, %c0_i32, %c0_i32_0 : i32, i32, i32
  }
}

</mosaic_0001>

<llo_original>
// kernel: tpu_custom_call.1
$region0: #{tpu_custom_call.1}
  #allocation0 [shape = 'u32[]', space=smem, size = 0x4, offset = 0x4, fixed_abs, tag = 'smem constant byte address 0x4 - core index']
  #allocation1 [shape = 'u32[144,128]{1,0:T(1,128)}', space=vmem, size = 0x12000, scoped, tag = 'internal scratch']
  #allocation2 [shape = 'f32[8,8]{1,0:T(8,128)}', space=vmem, size = 0x1000, scoped, tag = 'scratch operand']
  %s0 = inlined_call_operand.hbm [shape: f32[16,128], index: 0, kind: input, shape index: {}]
  %s1 = inlined_call_operand.hbm [shape: f32[16,128], index: 1, kind: input, shape index: {}]
  %s2 = inlined_call_operand.hbm [shape: f32[16,128], index: 2, kind: input, shape index: {}]
  %s3 = inlined_call_operand.hbm [shape: f32[16,128], index: 3, kind: input, shape index: {}]
  %s4 = inlined_call_operand.hbm [shape: f32[2,1,8], index: 4, kind: output, shape index: {}]
  %s5 = sld [smem:[#allocation0]]
  $region73: #{tpu_custom_call.1} parent=0
    _
  %s7 = ssub.s32 1, %s5
  %s8 = scalar_select 0, %s7, %s5
  $region1: #{tpu_custom_call.1} parent=0
    #allocation3 [shape = 'u8[8192]{0}', space=vmem, size = 0x2000, scoped, tag = 'input window, operand 0']
    #allocation4 [shape = 's32[2]{0}', space=sflag, size = 0x8, scoped, tag = 'scoped memory for tpu_custom_call.1']
    #allocation5 [shape = 's32[2]{0}', space=sflag, size = 0x8, scoped, tag = 'scoped memory for tpu_custom_call.1']
    #allocation6 [shape = 'u8[8192]{0}', space=vmem, size = 0x2000, scoped, tag = 'input window, operand 1']
    #allocation7 [shape = 's32[2]{0}', space=sflag, size = 0x8, scoped, tag = 'scoped memory for tpu_custom_call.1']
    #allocation8 [shape = 'u8[8192]{0}', space=vmem, size = 0x2000, scoped, tag = 'input window, operand 2']
    #allocation9 [shape = 'u8[8192]{0}', space=vmem, size = 0x2000, scoped, tag = 'input window, operand 3, single buffered']
    #allocation10 [shape = 's32[1]{0}', space=sflag, size = 0x4, scoped, tag = 'scoped memory for tpu_custom_call.1']
    #allocation11 [shape = 'u8[1024]{0}', space=vmem, size = 0x400, scoped, tag = 'output window, operand 0']
    %9 = vsyncpa [#allocation4], 0
    %s10 = scalar_lea.sflag [#allocation4], 1
    %11 = vsyncpa %s10, 0
    %12 = vsyncpa [#allocation7], 0
    %s13 = scalar_lea.sflag [#allocation7], 1
    %14 = vsyncpa %s13, 0
    %15 = vsyncpa [#allocation10], 0
    %16 = vsyncpa [#allocation5], 0
    %s17 = scalar_lea.sflag [#allocation5], 1
    %18 = vsyncpa %s17, 0
    loop: start=0, step=1, limit=4
    $region2: #{tpu_custom_call.1} parent=1 // loop_pre_header
      _
    $region3: #{tpu_custom_call.1} parent=1 // loop_header
      %s20 = sphi 0, %s24
      %p21 = scmp.ge.s32.totalorder %s20, 4
      %s27 = sphi 0, %s39
      %s28 = sphi 0, %s35
      %s29 = sphi 0, %s27
      %s30 = sphi 0, %s28
      %s31 = sphi 0, %s29
      %s32 = sphi 0, %s30
      %s42 = sphi 0, %s44
      %s45 = sphi 0, %s42
      %s46 = sphi 0, %s45
      %s62 = sphi 0, %s46
      %s94 = sphi 0, %s96
      %s97 = sphi 0, %s94
      %s98 = sphi 0, %s97
      %s114 = sphi 0, %s98
      %s120 = sphi 0, %s122
      %s123 = sphi 0, %s120
      %s124 = sphi 0, %s123
      %s140 = sphi 0, %s124
      %s146 = sphi 0, %s148
      %s149 = sphi 0, %s146
      %s150 = sphi 0, %s149
      %s166 = sphi 0, %s150
      %s172 = sphi 0, %s174
      %s175 = sphi 0, %s172
      %s176 = sphi 0, %s175
      %s192 = sphi 0, %s176
    $region4: #{tpu_custom_call.1} parent=1 // loop_header_branch
      %23 = sbr.rel (%p21) target = $region8
    $region5: #{tpu_custom_call.1} parent=1 // loop_body
      %s25 = ssub.s32 %s20, 1
      %s26 = ssub.s32 %s20, 2
      %s33 = sadd.s32 1, %s28
      %p34 = scmp.ge.s32.totalorder %s33, 1
      %s35 = scalar_select %p34, 0, %s33
      %s36 = sadd.s32 1, %s27
      %s37 = scalar_select %p34, %s36, %s27
      %p38 = scmp.ge.s32.totalorder %s37, 2
      %s39 = scalar_select %p38, 0, %s37
      %s40 = ssub.s32 %s27, %s39
      %p41 = scmp.eq.s32.totalorder %s40, 0
      %s43 = sadd.s32 %s42, 1
      %s44 = scalar_select %p41, %s42, %s43
      %p47 = pneg %p41
      %p48 = scmp.eq.s32.totalorder %s20, 1
      %p49 = por %p47, %p48
      %p50 = scmp.ne.s32.totalorder %s42, %s45
      %p51 = scmp.eq.s32.totalorder %s20, 0
      %p52 = por %p50, %p51
      %p53 = scmp.ne.s32.totalorder %s42, %s45
      %p54 = scmp.eq.s32.totalorder %s25, 1
      %p55 = por %p53, %p54
      %p56 = scmp.ne.s32.totalorder %s45, %s46
      %p57 = scmp.eq.s32.totalorder %s25, 0
      %p58 = por %p56, %p57
      %p59 = scmp.ne.s32.totalorder %s45, %s46
      %p60 = scmp.eq.s32.totalorder %s26, 1
      %p61 = por %p59, %p60
      %p63 = scmp.ne.s32.totalorder %s46, %s62
      %p64 = scmp.eq.s32.totalorder %s26, 0
      %p65 = por %p63, %p64
      %s66 = sadd.s32 %s27, 1
      %p67 = scmp.lt.s32.totalorder %s66, 0
      %s68 = ssub.s32 0, %s66
      %s69 = scalar_select %p67, %s68, %s66
      %s70 = sand.u32 %s69, 1
      %s71 = ssub.s32 0, %s70
      %s72 = scalar_select %p67, %s71, %s70
      %p73 = scmp.ne.s32.totalorder %s72, 0
      %p74 = scmp.lt.s32.totalorder %s72, 0
      %p75 = pnand %p74, %p73
      %p76 = pneg %p75
      %s77 = sadd.s32 %s72, 2
      %s78 = scalar_select %p76, %s77, %s72
      %s79 = sadd.s32 %s39, 1
      %p80 = scmp.lt.s32.totalorder %s79, 0
      %s81 = ssub.s32 0, %s79
      %s82 = scalar_select %p80, %s81, %s79
      %s83 = sand.u32 %s82, 1
      %s84 = ssub.s32 0, %s83
      %s85 = scalar_select %p80, %s84, %s83
      %p86 = scmp.ne.s32.totalorder %s85, 0
      %p87 = scmp.lt.s32.totalorder %s85, 0
      %p88 = pnand %p87, %p86
      %p89 = pneg %p88
      %s90 = sadd.s32 %s85, 2
      %s91 = scalar_select %p89, %s90, %s85
      %s92 = ssub.s32 %s78, %s91
      %p93 = scmp.eq.s32.totalorder %s92, 0
      %s95 = sadd.s32 %s94, 1
      %s96 = scalar_select %p93, %s94, %s95
      %p99 = pneg %p93
      %p100 = scmp.eq.s32.totalorder %s20, 1
      %p101 = por %p99, %p100
      %p102 = scmp.ne.s32.totalorder %s94, %s97
      %p103 = scmp.eq.s32.totalorder %s20, 0
      %p104 = por %p102, %p103
      %p105 = scmp.ne.s32.totalorder %s94, %s97
      %p106 = scmp.eq.s32.totalorder %s25, 1
      %p107 = por %p105, %p106
      %p108 = scmp.ne.s32.totalorder %s97, %s98
      %p109 = scmp.eq.s32.totalorder %s25, 0
      %p110 = por %p108, %p109
      %p111 = scmp.ne.s32.totalorder %s97, %s98
      %p112 = scmp.eq.s32.totalorder %s26, 1
      %p113 = por %p111, %p112
      %p115 = scmp.ne.s32.totalorder %s98, %s114
      %p116 = scmp.eq.s32.totalorder %s26, 0
      %p117 = por %p115, %p116
      %s118 = ssub.s32 %s27, %s39
      %p119 = scmp.eq.s32.totalorder %s118, 0
      %s121 = sadd.s32 %s120, 1
      %s122 = scalar_select %p119, %s120, %s121
      %p125 = pneg %p119
      %p126 = scmp.eq.s32.totalorder %s20, 1
      %p127 = por %p125, %p126
      %p128 = scmp.ne.s32.totalorder %s120, %s123
      %p129 = scmp.eq.s32.totalorder %s20, 0
      %p130 = por %p128, %p129
      %p131 = scmp.ne.s32.totalorder %s120, %s123
      %p132 = scmp.eq.s32.totalorder %s25, 1
      %p133 = por %p131, %p132
      %p134 = scmp.ne.s32.totalorder %s123, %s124
      %p135 = scmp.eq.s32.totalorder %s25, 0
      %p136 = por %p134, %p135
      %p137 = scmp.ne.s32.totalorder %s123, %s124
      %p138 = scmp.eq.s32.totalorder %s26, 1
      %p139 = por %p137, %p138
      %p141 = scmp.ne.s32.totalorder %s124, %s140
      %p142 = scmp.eq.s32.totalorder %s26, 0
      %p143 = por %p141, %p142
      %s144 = ssub.s32 %s28, %s35
      %p145 = scmp.eq.s32.totalorder %s144, 0
      %s147 = sadd.s32 %s146, 1
      %s148 = scalar_select %p145, %s146, %s147
      %p151 = pneg %p145
      %p152 = scmp.eq.s32.totalorder %s20, 1
      %p153 = por %p151, %p152
      %p154 = scmp.ne.s32.totalorder %s146, %s149
      %p155 = scmp.eq.s32.totalorder %s20, 0
      %p156 = por %p154, %p155
      %p157 = scmp.ne.s32.totalorder %s146, %s149
      %p158 = scmp.eq.s32.totalorder %s25, 1
      %p159 = por %p157, %p158
      %p160 = scmp.ne.s32.totalorder %s149, %s150
      %p161 = scmp.eq.s32.totalorder %s25, 0
      %p162 = por %p160, %p161
      %p163 = scmp.ne.s32.totalorder %s149, %s150
      %p164 = scmp.eq.s32.totalorder %s26, 1
      %p165 = por %p163, %p164
      %p167 = scmp.ne.s32.totalorder %s150, %s166
      %p168 = scmp.eq.s32.totalorder %s26, 0
      %p169 = por %p167, %p168
      %s170 = ssub.s32 %s27, %s39
      %p171 = scmp.eq.s32.totalorder %s170, 0
      %s173 = sadd.s32 %s172, 1
      %s174 = scalar_select %p171, %s172, %s173
      %p177 = pneg %p171
      %p178 = scmp.eq.s32.totalorder %s20, 1
      %p179 = por %p177, %p178
      %p180 = scmp.ne.s32.totalorder %s172, %s175
      %p181 = scmp.eq.s32.totalorder %s20, 0
      %p182 = por %p180, %p181
      %p183 = scmp.ne.s32.totalorder %s172, %s175
      %p184 = scmp.eq.s32.totalorder %s25, 1
      %p185 = por %p183, %p184
      %p186 = scmp.ne.s32.totalorder %s175, %s176
      %p187 = scmp.eq.s32.totalorder %s25, 0
      %p188 = por %p186, %p187
      %p189 = scmp.ne.s32.totalorder %s175, %s176
      %p190 = scmp.eq.s32.totalorder %s26, 1
      %p191 = por %p189, %p190
      %p193 = scmp.ne.s32.totalorder %s176, %s192
      %p194 = scmp.eq.s32.totalorder %s26, 0
      %p195 = por %p193, %p194
      %p196 = scmp.le.s32.totalorder 1, %s20
      %p197 = scmp.lt.s32.totalorder %s20, 3
      %p198 = pnand %p196, %p197
      %p199 = pneg %p198
      // Predicated region
      $region9: #{tpu_custom_call.1} parent=5 // pred_check
        _
      $region10: #{tpu_custom_call.1} parent=5 // pred_check_branch
        %201 = sbr.rel (%p198) target = $region12
      $region11: #{tpu_custom_call.1} parent=5 // pred_region
        %s202 = ssub.s32 %s20, 1
        // Predicated region
        $region13: #{tpu_custom_call.1} parent=11 // pred_check
          %p203 = pneg %p162
        $region14: #{tpu_custom_call.1} parent=11 // pred_check_branch
          %205 = sbr.rel (%p203) target = $region16
        $region15: #{tpu_custom_call.1} parent=11 // pred_region
          %s206 = smul.u32 2, %s30
          %s208 = ssub.s32 256, 256
          %209 = vsyncadd [#allocation10], %s208
          %s210 = smul.addr %s206, 128
          %s211 = scalar_lea.hbm %s3, %s210
          %s212 = sshll.u32 [#allocation9], 4
          %s213 = int_to_ptr.vmem [resolvable:$true] %s212
          %218 = dma.hbm_to_vmem [thread:$0]  %s211, 256, %s213, [#allocation10], 128, 128, 8
        $region16: #{tpu_custom_call.1} parent=11 // pred_fallthru
          _
      $region12: #{tpu_custom_call.1} parent=5 // pred_fallthru
        _
      %p219 = scmp.lt.s32.totalorder %s20, 2
      // Predicated region
      $region17: #{tpu_custom_call.1} parent=5 // pred_check
        %p220 = pneg %p219
      $region18: #{tpu_custom_call.1} parent=5 // pred_check_branch
        %222 = sbr.rel (%p220) target = $region20
      $region19: #{tpu_custom_call.1} parent=5 // pred_region
        // Predicated region
        $region21: #{tpu_custom_call.1} parent=19 // pred_check
          %p223 = pneg %p52
        $region22: #{tpu_custom_call.1} parent=19 // pred_check_branch
          %225 = sbr.rel (%p223) target = $region24
        $region23: #{tpu_custom_call.1} parent=19 // pred_region
          %s226 = sand.u32 %s42, 1
          %s227 = scalar_lea.sflag [#allocation4], %s226
          %s228 = sand.u32 %s42, 1
          %s229 = smul.addr %s228, 8
          %s230 = scalar_lea.vmem [#allocation3], %s229
          %s232 = ssub.s32 128, 128
          %233 = vsyncadd %s227, %s232
          %s234 = smul.addr %s27, 128
          %s235 = scalar_lea.hbm %s0, %s234
          %s237 = sshll.u32 %s230, 4
          %s238 = int_to_ptr.vmem [resolvable:$true] %s237
          %240 = dma.hbm_to_vmem [thread:$0]  %s235, 128, %s238, %s227
        $region24: #{tpu_custom_call.1} parent=19 // pred_fallthru
          _
        // Predicated region
        $region25: #{tpu_custom_call.1} parent=19 // pred_check
          %p241 = pneg %p104
        $region26: #{tpu_custom_call.1} parent=19 // pred_check_branch
          %243 = sbr.rel (%p241) target = $region28
        $region27: #{tpu_custom_call.1} parent=19 // pred_region
          %s244 = sand.u32 %s20, 1
          %s245 = scalar_lea.sflag [#allocation7], %s244
          %s246 = sand.u32 %s94, 1
          %s247 = smul.addr %s246, 8
          %s248 = scalar_lea.vmem [#allocation6], %s247
          %s249 = sadd.s32 %s27, 1
          %p250 = scmp.lt.s32.totalorder %s249, 0
          %s251 = ssub.s32 0, %s249
          %s252 = scalar_select %p250, %s251, %s249
          %s253 = sand.u32 %s252, 1
          %s254 = ssub.s32 0, %s253
          %s255 = scalar_select %p250, %s254, %s253
          %p256 = scmp.ne.s32.totalorder %s255, 0
          %p257 = scmp.lt.s32.totalorder %s255, 0
          %p258 = pnand %p257, %p256
          %p259 = pneg %p258
          %s260 = sadd.s32 %s255, 2
          %s261 = scalar_select %p259, %s260, %s255
          %s263 = ssub.s32 128, 128
          %264 = vsyncadd %s245, %s263
          %s265 = smul.addr %s261, 128
          %s266 = scalar_lea.hbm %s1, %s265
          %s268 = sshll.u32 %s248, 4
          %s269 = int_to_ptr.vmem [resolvable:$true] %s268
          %271 = dma.hbm_to_vmem [thread:$0]  %s266, 128, %s269, %s245
        $region28: #{tpu_custom_call.1} parent=19 // pred_fallthru
          _
        // Predicated region
        $region29: #{tpu_custom_call.1} parent=19 // pred_check
          %p272 = pneg %p130
        $region30: #{tpu_custom_call.1} parent=19 // pred_check_branch
          %274 = sbr.rel (%p272) target = $region32
        $region31: #{tpu_custom_call.1} parent=19 // pred_region
          %s275 = sand.u32 %s20, 1
          %s276 = scalar_lea.sflag [#allocation7], %s275
          %s277 = sand.u32 %s120, 1
          %s278 = smul.addr %s277, 8
          %s279 = scalar_lea.vmem [#allocation8], %s278
          %s281 = ssub.s32 128, 128
          %282 = vsyncadd %s276, %s281
          %s283 = smul.addr %s27, 128
          %s284 = scalar_lea.hbm %s2, %s283
          %s286 = sshll.u32 %s279, 4
          %s287 = int_to_ptr.vmem [resolvable:$true] %s286
          %289 = dma.hbm_to_vmem [thread:$0]  %s284, 128, %s287, %s276
        $region32: #{tpu_custom_call.1} parent=19 // pred_fallthru
          _
      $region20: #{tpu_custom_call.1} parent=5 // pred_fallthru
        _
      %p290 = scmp.le.s32.totalorder 1, %s20
      %p291 = scmp.lt.s32.totalorder %s20, 3
      %p292 = pnand %p290, %p291
      %p293 = pneg %p292
      // Predicated region
      $region33: #{tpu_custom_call.1} parent=5 // pred_check
        _
      $region34: #{tpu_custom_call.1} parent=5 // pred_check_branch
        %295 = sbr.rel (%p292) target = $region36
      $region35: #{tpu_custom_call.1} parent=5 // pred_region
        %s296 = ssub.s32 %s20, 1
        %s297 = sand.u32 %s45, 1
        %s298 = scalar_lea.sflag [#allocation4], %s297
        %s299 = sand.u32 %s45, 1
        %s300 = smul.addr %s299, 8
        %s301 = scalar_lea.vmem [#allocation3], %s300
        // Predicated region
        $region37: #{tpu_custom_call.1} parent=35 // pred_check
          %p302 = pneg %p58
        $region38: #{tpu_custom_call.1} parent=35 // pred_check_branch
          %304 = sbr.rel (%p302) target = $region40
        $region39: #{tpu_custom_call.1} parent=35 // pred_region
          %305 = dma.done %s298, 128
        $region40: #{tpu_custom_call.1} parent=35 // pred_fallthru
          _
        %s306 = sand.u32 %s25, 1
        %s307 = scalar_lea.sflag [#allocation7], %s306
        %s308 = sand.u32 %s97, 1
        %s309 = smul.addr %s308, 8
        %s310 = scalar_lea.vmem [#allocation6], %s309
        // Predicated region
        $region41: #{tpu_custom_call.1} parent=35 // pred_check
          %p311 = pneg %p110
        $region42: #{tpu_custom_call.1} parent=35 // pred_check_branch
          %313 = sbr.rel (%p311) target = $region44
        $region43: #{tpu_custom_call.1} parent=35 // pred_region
          %314 = dma.done %s307, 128
        $region44: #{tpu_custom_call.1} parent=35 // pred_fallthru
          _
        %s315 = sand.u32 %s25, 1
        %s316 = scalar_lea.sflag [#allocation7], %s315
        %s317 = sand.u32 %s123, 1
        %s318 = smul.addr %s317, 8
        %s319 = scalar_lea.vmem [#allocation8], %s318
        // Predicated region
        $region45: #{tpu_custom_call.1} parent=35 // pred_check
          %p320 = pneg %p136
        $region46: #{tpu_custom_call.1} parent=35 // pred_check_branch
          %322 = sbr.rel (%p320) target = $region48
        $region47: #{tpu_custom_call.1} parent=35 // pred_region
          %323 = dma.done %s316, 128
        $region48: #{tpu_custom_call.1} parent=35 // pred_fallthru
          _
        // Predicated region
        $region49: #{tpu_custom_call.1} parent=35 // pred_check
          %p324 = pneg %p162
        $region50: #{tpu_custom_call.1} parent=35 // pred_check_branch
          %326 = sbr.rel (%p324) target = $region52
        $region51: #{tpu_custom_call.1} parent=35 // pred_region
          %327 = dma.done [#allocation10], 256
        $region52: #{tpu_custom_call.1} parent=35 // pred_fallthru
          _
        %s328 = sand.u32 %s45, 1
        %s329 = scalar_lea.sflag [#allocation4], %s328
        %s330 = sand.u32 %s45, 1
        %s331 = smul.addr %s330, 8
        %s332 = scalar_lea.vmem [#allocation3], %s331
        %p333 = pneg %p58
        %p334 = pneg %p55
        %s335 = sand.u32 %s25, 1
        %s336 = scalar_lea.sflag [#allocation7], %s335
        %s337 = sand.u32 %s97, 1
        %s338 = smul.addr %s337, 8
        %s339 = scalar_lea.vmem [#allocation6], %s338
        %p340 = pneg %p110
        %p341 = pneg %p107
        %s342 = sand.u32 %s25, 1
        %s343 = scalar_lea.sflag [#allocation7], %s342
        %s344 = sand.u32 %s123, 1
        %s345 = smul.addr %s344, 8
        %s346 = scalar_lea.vmem [#allocation8], %s345
        %p347 = pneg %p136
        %p348 = pneg %p133
        %p349 = pneg %p162
        %p350 = pneg %p159
        %p351 = pneg %p188
        %p352 = pneg %p185
        %s353 = sand.u32 %s175, 1
        %s354 = scalar_lea.sflag [#allocation5], %s353
        %s355 = sand.u32 %s175, 1
        %s356 = scalar_lea.vmem [#allocation11], %s355
        %s357 = sadd.s32 %s29, 1
        %p358 = scmp.lt.s32.totalorder %s357, 0
        %s359 = ssub.s32 0, %s357
        %s360 = scalar_select %p358, %s359, %s357
        %s361 = sand.u32 %s360, 1
        %s362 = ssub.s32 0, %s361
        %s363 = scalar_select %p358, %s362, %s361
        %p364 = scmp.ne.s32.totalorder %s363, 0
        %p365 = scmp.lt.s32.totalorder %s363, 0
        %p366 = pnand %p365, %p364
        %p367 = pneg %p366
        %s368 = sadd.s32 %s363, 2
        %s369 = scalar_select %p367, %s368, %s363
        %s370 = smul.u32 2, %s30
        %p371 = scmp.eq.s32.totalorder %s30, 0
        // Predicated region
        $region53: #{tpu_custom_call.1} parent=35 // pred_check
          %p372 = pneg %p371
        $region54: #{tpu_custom_call.1} parent=35 // pred_check_branch
          %374 = sbr.rel (%p372) target = $region56
        $region55: #{tpu_custom_call.1} parent=35 // pred_region
          %vm375 = vcmask 64512
          %376 = vst.msk [vmem:[#allocation2] sm:$0xff] %vm375, 0.0
        $region56: #{tpu_custom_call.1} parent=35 // pred_fallthru
          _
        %v377 = vld [vmem:[#allocation9] sm:$0xff]
        %v378 = vld [vmem:[#allocation9 + $0x8] sm:$0xff]
        %v379 = vld [vmem:[%s301] sm:$0xff]
        %380 = vmatprep.subr.mxu0 0.0
        %381 = vmatpush1.xpose.msra.mxu0 0.0
        %382 = vmatprep.subr.mxu0 0.0
        %383 = vmatpush1.xpose.msra.mxu0 0.0
        %384 = vmatprep.subr.mxu0 0.0
        %385 = vmatpush1.xpose.msra.mxu0 0.0
        %386 = vmatprep.subr.mxu0 0.0
        %387 = vmatpush1.xpose.msra.mxu0 0.0
        %388 = vmatprep.subr.mxu0 0.0
        %389 = vmatpush1.xpose.msra.mxu0 0.0
        %390 = vmatprep.subr.mxu0 0.0
        %391 = vmatpush1.xpose.msra.mxu0 0.0
        %392 = vmatprep.subr.mxu0 0.0
        %393 = vmatpush1.xpose.msra.mxu0 0.0
        %394 = vmatprep.subr.mxu0 0.0
        %395 = vmatpush1.xpose.msra.mxu0 0.0
        %396 = vmatprep.subr.mxu0 0.0
        %397 = vmatpush1.xpose.msra.mxu0 0.0
        %398 = vmatprep.subr.mxu0 0.0
        %399 = vmatpush1.xpose.msra.mxu0 0.0
        %400 = vmatprep.subr.mxu0 0.0
        %401 = vmatpush1.xpose.msra.mxu0 0.0
        %402 = vmatprep.subr.mxu0 0.0
        %403 = vmatpush1.xpose.msra.mxu0 0.0
        %404 = vmatprep.subr.mxu0 0.0
        %405 = vmatpush1.xpose.msra.mxu0 0.0
        %406 = vmatprep.subr.mxu0 0.0
        %407 = vmatpush1.xpose.msra.mxu0 0.0
        %408 = vmatprep.subr.mxu0 0.0
        %409 = vmatpush1.xpose.msra.mxu0 0.0
        %410 = vmatprep.subr.mxu0 0.0
        %411 = vmatpush1.xpose.msra.mxu0 %v379
        %412 = vmatprep.subr.mxu0 0.0
        %413 = vmatpush2.xpose.msra.mxu0 0.0
        %414 = vmatprep.subr.mxu0 0.0
        %415 = vmatpush2.xpose.msra.mxu0 0.0
        %416 = vmatprep.subr.mxu0 0.0
        %417 = vmatpush2.xpose.msra.mxu0 0.0
        %418 = vmatprep.subr.mxu0 0.0
        %419 = vmatpush2.xpose.msra.mxu0 0.0
        %420 = vmatprep.subr.mxu0 0.0
        %421 = vmatpush2.xpose.msra.mxu0 0.0
        %422 = vmatprep.subr.mxu0 0.0
        %423 = vmatpush2.xpose.msra.mxu0 0.0
        %424 = vmatprep.subr.mxu0 0.0
        %425 = vmatpush2.xpose.msra.mxu0 0.0
        %426 = vmatprep.subr.mxu0 0.0
        %427 = vmatpush2.xpose.msra.mxu0 0.0
        %428 = vmatprep.subr.mxu0 0.0
        %429 = vmatpush2.xpose.msra.mxu0 0.0
        %430 = vmatprep.subr.mxu0 0.0
        %431 = vmatpush2.xpose.msra.mxu0 0.0
        %432 = vmatprep.subr.mxu0 0.0
        %433 = vmatpush2.xpose.msra.mxu0 0.0
        %434 = vmatprep.subr.mxu0 0.0
        %435 = vmatpush2.xpose.msra.mxu0 0.0
        %436 = vmatprep.subr.mxu0 0.0
        %437 = vmatpush2.xpose.msra.mxu0 0.0
        %438 = vmatprep.subr.mxu0 0.0
        %439 = vmatpush2.xpose.msra.mxu0 0.0
        %440 = vmatprep.subr.mxu0 0.0
        %441 = vmatpush2.xpose.msra.mxu0 0.0
        %442 = vmatprep.subr.mxu0 0.0
        %443 = vmatpush2.xpose.msra.mxu0 0.0
        %444 = vmatprep.mubr.f32.mxu0 0.0
        %445 = vmatmul.mubr.f32.gmra.mxu0 %v377
        %v446 = vpop.f32.mrf.mxu0
        %v447 = vadd.f32 0.0, %v446
        %v448 = vpop.f32.mrf.mxu0
        %449 = vmatprep.mubr.f32.mxu0 0.0
        %450 = vmatmul.mubr.f32.gmra.mxu0 %v378
        %v451 = vpop.f32.mrf.mxu0
        %v452 = vadd.f32 0.0, %v451
        %v453 = vpop.f32.mrf.mxu0
        %454 = vdwg.mxu0
        %v455 = vmul.f32 %v447, 1.442695
        %v456 = vpow.pop %v455
        %v457 = vmul.f32 %v452, 1.442695
        %v458 = vpow.pop %v457
        %v459 = vld [vmem:[#allocation2] sm:$0xff]
        %vm460 = vcmask 64512
        %v461 = vsel %vm460, %v456, 0.0
        %v462 = vsel %vm460, %v458, 0.0
        %v463 = vadd.f32 %v461, %v462
        %v464 = vadd.f32 %v459, %v463
        %465 = vst.msk [vmem:[#allocation2] sm:$0xff] %vm460, %v464
        // Predicated region
        $region57: #{tpu_custom_call.1} parent=35 // pred_check
          %p466 = pneg %p371
        $region58: #{tpu_custom_call.1} parent=35 // pred_check_branch
          %468 = sbr.rel (%p466) target = $region60
        $region59: #{tpu_custom_call.1} parent=35 // pred_region
          %v469 = vld [vmem:[%s301] sm:$0xff]
          %v470 = vld [vmem:[%s310] sm:$0xff]
          %v471 = vmul.f32 %v469, %v470
          %472 = vmatprep.subr.mxu0 0.0
          %473 = vmatpush1.xpose.msra.mxu0 0.0
          %474 = vmatprep.subr.mxu0 0.0
          %475 = vmatpush1.xpose.msra.mxu0 0.0
          %476 = vmatprep.subr.mxu0 0.0
          %477 = vmatpush1.xpose.msra.mxu0 0.0
          %478 = vmatprep.subr.mxu0 0.0
          %479 = vmatpush1.xpose.msra.mxu0 0.0
          %480 = vmatprep.subr.mxu0 0.0
          %481 = vmatpush1.xpose.msra.mxu0 0.0
          %482 = vmatprep.subr.mxu0 0.0
          %483 = vmatpush1.xpose.msra.mxu0 0.0
          %484 = vmatprep.subr.mxu0 0.0
          %485 = vmatpush1.xpose.msra.mxu0 0.0
          %486 = vmatprep.subr.mxu0 0.0
          %487 = vmatpush1.xpose.msra.mxu0 0.0
          %488 = vmatprep.subr.mxu0 0.0
          %489 = vmatpush1.xpose.msra.mxu0 0.0
          %490 = vmatprep.subr.mxu0 0.0
          %491 = vmatpush1.xpose.msra.mxu0 0.0
          %492 = vmatprep.subr.mxu0 0.0
          %493 = vmatpush1.xpose.msra.mxu0 0.0
          %494 = vmatprep.subr.mxu0 0.0
          %495 = vmatpush1.xpose.msra.mxu0 0.0
          %496 = vmatprep.subr.mxu0 0.0
          %497 = vmatpush1.xpose.msra.mxu0 0.0
          %498 = vmatprep.subr.mxu0 0.0
          %499 = vmatpush1.xpose.msra.mxu0 0.0
          %500 = vmatprep.subr.mxu0 0.0
          %501 = vmatpush1.xpose.msra.mxu0 0.0
          %502 = vmatprep.subr.mxu0 0.0
          %503 = vmatpush1.xpose.msra.mxu0 %v471
          %504 = vmatprep.subr.mxu0 0.0
          %505 = vmatpush2.xpose.msra.mxu0 0.0
          %506 = vmatprep.subr.mxu0 0.0
          %507 = vmatpush2.xpose.msra.mxu0 0.0
          %508 = vmatprep.subr.mxu0 0.0
          %509 = vmatpush2.xpose.msra.mxu0 0.0
          %510 = vmatprep.subr.mxu0 0.0
          %511 = vmatpush2.xpose.msra.mxu0 0.0
          %512 = vmatprep.subr.mxu0 0.0
          %513 = vmatpush2.xpose.msra.mxu0 0.0
          %514 = vmatprep.subr.mxu0 0.0
          %515 = vmatpush2.xpose.msra.mxu0 0.0
          %516 = vmatprep.subr.mxu0 0.0
          %517 = vmatpush2.xpose.msra.mxu0 0.0
          %518 = vmatprep.subr.mxu0 0.0
          %519 = vmatpush2.xpose.msra.mxu0 0.0
          %520 = vmatprep.subr.mxu0 0.0
          %521 = vmatpush2.xpose.msra.mxu0 0.0
          %522 = vmatprep.subr.mxu0 0.0
          %523 = vmatpush2.xpose.msra.mxu0 0.0
          %524 = vmatprep.subr.mxu0 0.0
          %525 = vmatpush2.xpose.msra.mxu0 0.0
          %526 = vmatprep.subr.mxu0 0.0
          %527 = vmatpush2.xpose.msra.mxu0 0.0
          %528 = vmatprep.subr.mxu0 0.0
          %529 = vmatpush2.xpose.msra.mxu0 0.0
          %530 = vmatprep.subr.mxu0 0.0
          %531 = vmatpush2.xpose.msra.mxu0 0.0
          %532 = vmatprep.subr.mxu0 0.0
          %533 = vmatpush2.xpose.msra.mxu0 0.0
          %534 = vmatprep.subr.mxu0 0.0
          %535 = vmatpush2.xpose.msra.mxu0 0.0
          %536 = vmatprep.mubr.f32.mxu0 0.0
          %537 = vmatmul.mubr.f32.gmra.mxu0 1.0
          %v538 = vpop.f32.mrf.mxu0
          %v539 = vadd.f32 0.0, %v538
          %v540 = vpop.f32.mrf.mxu0
          %541 = vdwg.mxu0
          %v542 = vld [vmem:[%s319] sm:$0xff]
          %v543 = vmul.f32 %v469, %v542
          %544 = vmatprep.subr.mxu0 0.0
          %545 = vmatpush1.xpose.msra.mxu0 0.0
          %546 = vmatprep.subr.mxu0 0.0
          %547 = vmatpush1.xpose.msra.mxu0 0.0
          %548 = vmatprep.subr.mxu0 0.0
          %549 = vmatpush1.xpose.msra.mxu0 0.0
          %550 = vmatprep.subr.mxu0 0.0
          %551 = vmatpush1.xpose.msra.mxu0 0.0
          %552 = vmatprep.subr.mxu0 0.0
          %553 = vmatpush1.xpose.msra.mxu0 0.0
          %554 = vmatprep.subr.mxu0 0.0
          %555 = vmatpush1.xpose.msra.mxu0 0.0
          %556 = vmatprep.subr.mxu0 0.0
          %557 = vmatpush1.xpose.msra.mxu0 0.0
          %558 = vmatprep.subr.mxu0 0.0
          %559 = vmatpush1.xpose.msra.mxu0 0.0
          %560 = vmatprep.subr.mxu0 0.0
          %561 = vmatpush1.xpose.msra.mxu0 0.0
          %562 = vmatprep.subr.mxu0 0.0
          %563 = vmatpush1.xpose.msra.mxu0 0.0
          %564 = vmatprep.subr.mxu0 0.0
          %565 = vmatpush1.xpose.msra.mxu0 0.0
          %566 = vmatprep.subr.mxu0 0.0
          %567 = vmatpush1.xpose.msra.mxu0 0.0
          %568 = vmatprep.subr.mxu0 0.0
          %569 = vmatpush1.xpose.msra.mxu0 0.0
          %570 = vmatprep.subr.mxu0 0.0
          %571 = vmatpush1.xpose.msra.mxu0 0.0
          %572 = vmatprep.subr.mxu0 0.0
          %573 = vmatpush1.xpose.msra.mxu0 0.0
          %574 = vmatprep.subr.mxu0 0.0
          %575 = vmatpush1.xpose.msra.mxu0 %v543
          %576 = vmatprep.subr.mxu0 0.0
          %577 = vmatpush2.xpose.msra.mxu0 0.0
          %578 = vmatprep.subr.mxu0 0.0
          %579 = vmatpush2.xpose.msra.mxu0 0.0
          %580 = vmatprep.subr.mxu0 0.0
          %581 = vmatpush2.xpose.msra.mxu0 0.0
          %582 = vmatprep.subr.mxu0 0.0
          %583 = vmatpush2.xpose.msra.mxu0 0.0
          %584 = vmatprep.subr.mxu0 0.0
          %585 = vmatpush2.xpose.msra.mxu0 0.0
          %586 = vmatprep.subr.mxu0 0.0
          %587 = vmatpush2.xpose.msra.mxu0 0.0
          %588 = vmatprep.subr.mxu0 0.0
          %589 = vmatpush2.xpose.msra.mxu0 0.0
          %590 = vmatprep.subr.mxu0 0.0
          %591 = vmatpush2.xpose.msra.mxu0 0.0
          %592 = vmatprep.subr.mxu0 0.0
          %593 = vmatpush2.xpose.msra.mxu0 0.0
          %594 = vmatprep.subr.mxu0 0.0
          %595 = vmatpush2.xpose.msra.mxu0 0.0
          %596 = vmatprep.subr.mxu0 0.0
          %597 = vmatpush2.xpose.msra.mxu0 0.0
          %598 = vmatprep.subr.mxu0 0.0
          %599 = vmatpush2.xpose.msra.mxu0 0.0
          %600 = vmatprep.subr.mxu0 0.0
          %601 = vmatpush2.xpose.msra.mxu0 0.0
          %602 = vmatprep.subr.mxu0 0.0
          %603 = vmatpush2.xpose.msra.mxu0 0.0
          %604 = vmatprep.subr.mxu0 0.0
          %605 = vmatpush2.xpose.msra.mxu0 0.0
          %606 = vmatprep.subr.mxu0 0.0
          %607 = vmatpush2.xpose.msra.mxu0 0.0
          %608 = vmatprep.mubr.f32.mxu0 0.0
          %609 = vmatmul.mubr.f32.gmra.mxu0 1.0
          %v610 = vpop.f32.mrf.mxu0
          %v611 = vadd.f32 0.0, %v610
          %v612 = vpop.f32.mrf.mxu0
          %613 = vdwg.mxu0
          %v614 = vld [vmem:[#allocation2] sm:$0xff]
          %v615 = vsel %vm460, %v614, 0.0
          %v616 = vrot.slane %v615, 4
          %v617 = vadd.f32 %v615, %v616
          %v618 = vrot.slane %v617, 2
          %v619 = vadd.f32 %v617, %v618
          %v620 = vrot.slane %v619, 1
          %v621 = vadd.f32 %v619, %v620
          %v622 = vmul.f32 %v611, 1.442695
          %v623 = vpow.pop %v622
          %v624 = vsub.f32 %v621, %v623
          %v625 = vmax.f32 %v624, 1e-30
          %v626 = vlog2.pop %v625
          %v627 = vmul.f32 %v626, 0.6931472
          %v628 = vsub.f32 %v627, %v539
          %vm629 = vcmask 57344
          %630 = vst.msk [vmem:[%s356] sm:$0x1] %vm629, %v628
        $region60: #{tpu_custom_call.1} parent=35 // pred_fallthru
          _
        %s631 = sand.u32 %s175, 1
        %s632 = scalar_lea.sflag [#allocation5], %s631
        %s633 = sand.u32 %s175, 1
        %s634 = scalar_lea.vmem [#allocation11], %s633
        // Predicated region
        $region61: #{tpu_custom_call.1} parent=35 // pred_check
          %p635 = pneg %p185
        $region62: #{tpu_custom_call.1} parent=35 // pred_check_branch
          %637 = sbr.rel (%p635) target = $region64
        $region63: #{tpu_custom_call.1} parent=35 // pred_region
          %s639 = ssub.s32 16, 16
          %640 = vsyncadd %s632, %s639
          %s641 = smul.addr %s29, 16
          %s642 = scalar_lea.hbm %s4, %s641
          %s644 = sshll.u32 %s634, 4
          %s645 = int_to_ptr.vmem [resolvable:$true] %s644
          %647 = dma.vmem_to_hbm [thread:$0]  %s645, 16, %s642, %s632
        $region64: #{tpu_custom_call.1} parent=35 // pred_fallthru
          _
      $region36: #{tpu_custom_call.1} parent=5 // pred_fallthru
        _
      %p648 = scmp.le.s32.totalorder 2, %s20
      // Predicated region
      $region65: #{tpu_custom_call.1} parent=5 // pred_check
        %p649 = pneg %p648
      $region66: #{tpu_custom_call.1} parent=5 // pred_check_branch
        %651 = sbr.rel (%p649) target = $region68
      $region67: #{tpu_custom_call.1} parent=5 // pred_region
        %s652 = ssub.s32 %s20, 2
        // Predicated region
        $region69: #{tpu_custom_call.1} parent=67 // pred_check
          %p653 = pneg %p191
        $region70: #{tpu_custom_call.1} parent=67 // pred_check_branch
          %655 = sbr.rel (%p653) target = $region72
        $region71: #{tpu_custom_call.1} parent=67 // pred_region
          %s656 = sand.u32 %s176, 1
          %s657 = scalar_lea.sflag [#allocation5], %s656
          %s658 = sand.u32 %s176, 1
          %s659 = scalar_lea.vmem [#allocation11], %s658
          %660 = dma.done %s657, 16
        $region72: #{tpu_custom_call.1} parent=67 // pred_fallthru
          _
      $region68: #{tpu_custom_call.1} parent=5 // pred_fallthru
        _
    $region6: #{tpu_custom_call.1} parent=1 // loop_footer
      %s24 = sadd.s32 1, %s20
    $region7: #{tpu_custom_call.1} parent=1 // loop_footer_branch
      %19 = sbr.rel target = $region3
    $region8: #{tpu_custom_call.1} parent=1 // loop_exit
      _
    %661 = vsyncpa [#allocation4], 1
    %s662 = scalar_lea.sflag [#allocation4], 1
    %663 = vsyncpa %s662, 1
    %664 = vsyncpa [#allocation7], 1
    %s665 = scalar_lea.sflag [#allocation7], 1
    %666 = vsyncpa %s665, 1
    %667 = vsyncpa [#allocation10], 1
    %668 = vsyncpa [#allocation5], 1
    %s669 = scalar_lea.sflag [#allocation5], 1
    %670 = vsyncpa %s669, 1

</llo_original>
